<compile_context>
chip_gen: v7x
topology: tpu7x:2x2x1
jax: 0.10.0
libtpu: 0.0.40
codegen_flags: <defaults>
</compile_context>

<pallas_src>
import functools

import jax
import jax.numpy as jnp
from jax import lax
from jax.experimental import pallas as pl
from jax.experimental.pallas import tpu as pltpu


def _downsample_kernel(p_ref, w_ref, b_ref, o_ref):
    """One MXU matmul per M tile: (tile_m, 9*Cin) @ (9*Cin, Cout) + bias."""
    acc = jnp.dot(p_ref[...], w_ref[...], preferred_element_type=jnp.float32)
    o_ref[...] = (acc + b_ref[...]).astype(o_ref.dtype)


def _pick_tile_m(m, cin, cout, requested):
    """M tile: <= requested, multiple of 8, fits VMEM budget, >= 2 grid tiles."""
    kdim = 9 * cin
    budget = 40 * 1024 * 1024  # conservative: v7x TensorCore has 64 MiB VMEM
    t = max(8, (int(requested) // 8) * 8)
    per_row = kdim * 2 + cout * 4  # bf16 patches row + f32 output row
    # Double-buffered input+output tiles + resident weight slab must fit.
    while t > 8 and 2 * t * per_row + kdim * cout * 2 > budget:
        t = max(8, ((t // 2) // 8) * 8)
    # Keep at least 2 tiles on the parallel M axis (v7x has 2 TCs per chip).
    while t > 8 and (m + t - 1) // t < 2:
        t = max(8, ((t // 2) // 8) * 8)
    return t


@functools.partial(jax.jit, static_argnames=("tile_m",))
def downsample_forward(x_nchw, weight, bias, *, tile_m=512):
    """Conv2d(C, C, kernel_size=3, stride=2, padding=1) forward.

    x_nchw: (N, C, H, W) float32
    weight: (C_out, C_in, 3, 3) float32   (PyTorch layout)
    bias:   (C_out,) float32
    returns (N, C_out, H_out, W_out), H_out = (H+1)//2, W_out = (W+1)//2
    """
    n, cin, h, w = x_nchw.shape
    cout = weight.shape[0]
    ho = (h + 2 - 3) // 2 + 1
    wo = (w + 2 - 3) // 2 + 1
    kdim = 9 * cin
    m = n * ho * wo

    # NCHW -> NHWC (channels on the lane axis), cast to bf16 so the im2col
    # tensor costs half the HBM bandwidth; zero-pad spatial dims by 1.
    x = jnp.transpose(x_nchw, (0, 2, 3, 1)).astype(jnp.bfloat16)
    x_pad = jnp.pad(x, ((0, 0), (1, 1), (1, 1), (0, 0)))

    # im2col with the 9 taps folded into the contraction dimension:
    # patches[m, (kh*3+kw)*cin + ci] = x_pad[b, 2*oh+kh, 2*ow+kw, ci]
    slabs = []
    for kh in range(3):
        for kw in range(3):
            slab = x_pad[:, kh::2, :, :][:, :ho, :, :]
            slab = slab[:, :, kw::2, :][:, :, :wo, :]
            slabs.append(slab)
    patches = jnp.concatenate(slabs, axis=-1).reshape(m, kdim)

    tile = _pick_tile_m(m, cin, cout, tile_m)
    m_pad = ((m + tile - 1) // tile) * tile
    if m_pad != m:
        # Rare: only for shapes where no nice tile divides M (tile adapts first).
        patches = jnp.pad(patches, ((0, m_pad - m), (0, 0)))

    # (Cout, Cin, 3, 3) -> (kh, kw, Cin, Cout) -> (9*Cin, Cout), bf16 for MXU.
    w_mat = (
        jnp.transpose(weight, (2, 3, 1, 0)).reshape(kdim, cout).astype(jnp.bfloat16)
    )
    b_row = bias.reshape(1, cout).astype(jnp.float32)

    grid = (m_pad // tile,)
    vmem_needed = 2 * tile * (kdim * 2 + cout * 4) + kdim * cout * 2 + cout * 4
    vmem_limit = int(min(max(2 * vmem_needed, 32 * 1024 * 1024), 100 * 1024 * 1024))

    out_flat = pl.pallas_call(
        _downsample_kernel,
        out_shape=jax.ShapeDtypeStruct((m_pad, cout), x_nchw.dtype),
        grid_spec=pltpu.PrefetchScalarGridSpec(
            num_scalar_prefetch=0,
            grid=grid,
            in_specs=[
                pl.BlockSpec((tile, kdim), lambda i: (i, 0)),
                # Constant block index -> weights / bias DMA'd once, stay resident.
                pl.BlockSpec((kdim, cout), lambda i: (0, 0)),
                pl.BlockSpec((1, cout), lambda i: (0, 0)),
            ],
            out_specs=pl.BlockSpec((tile, cout), lambda i: (i, 0)),
        ),
        compiler_params=pltpu.CompilerParams(
            dimension_semantics=("parallel",),
            vmem_limit_bytes=vmem_limit,
        ),
    )(patches, w_mat, b_row)

    out = out_flat[:m].reshape(n, ho, wo, cout)
    return jnp.transpose(out, (0, 3, 1, 2))  # back to NCHW


if __name__ == "__main__":
    key = jax.random.PRNGKey(0)
    kx, kw_, kb = jax.random.split(key, 3)

    N, C, H, W = 2, 4, 16, 16
    x = jax.random.normal(kx, (N, C, H, W), dtype=jnp.float32)
    # Deterministic synthetic parameters (PyTorch Conv2d shapes).
    weight = jax.random.normal(kw_, (C, C, 3, 3), dtype=jnp.float32) * 0.1
    bias = jax.random.normal(kb, (C,), dtype=jnp.float32) * 0.1

    out = downsample_forward(x, weight, bias)
    out = jax.block_until_ready(out)

    # Reference: XLA conv on the same bf16-rounded inputs (the kernel feeds the
    # MXU bf16 operands and accumulates in f32).
    x_r = x.astype(jnp.bfloat16).astype(jnp.float32)
    w_r = weight.astype(jnp.bfloat16).astype(jnp.float32)
    ref = lax.conv_general_dilated(
        x_r, w_r,
        window_strides=(2, 2),
        padding=((1, 1), (1, 1)),
        dimension_numbers=("NCHW", "OIHW", "NCHW"),
        precision=lax.Precision.HIGHEST,
    ) + bias.reshape(1, C, 1, 1)

    assert out.shape == (N, C, (H + 1) // 2, (W + 1) // 2), out.shape
    err = float(jnp.max(jnp.abs(out - ref)))
    assert err < 2e-3, err
    print("KERNEL_OK")
</pallas_src>

<mosaic_0001>
module attributes {stable_mosaic.version = 11 : i64} {
  func.func @_downsample_kernel(%arg0: i32, %arg1: memref<64x36xbf16, #tpu.memory_space<vmem>>, %arg2: memref<36x4xbf16, #tpu.memory_space<vmem>>, %arg3: memref<1x4xf32, #tpu.memory_space<vmem>>, %arg4: memref<64x4xf32, #tpu.memory_space<vmem>>) attributes {dimension_semantics = [#tpu.dimension_semantics<parallel>], iteration_bounds = array<i64: 2>, scalar_prefetch = 0 : i64, scratch_operands = 0 : i64, tpu.core_type = #tpu.core_type<tc>, window_params = [{transform_indices = @transform_0, window_bounds = array<i64: 64, 36>}, {pipeline_mode = #tpu.pipeline_mode<synchronous>, transform_indices = @transform_1, window_bounds = array<i64: 36, 4>}, {pipeline_mode = #tpu.pipeline_mode<synchronous>, transform_indices = @transform_2, window_bounds = array<i64: 1, 4>}, {transform_indices = @transform_3, window_bounds = array<i64: 64, 4>}]} {
    %c0 = arith.constant 0 : index
    %c0_0 = arith.constant 0 : index
    %0 = vector.load %arg1[%c0, %c0_0] : memref<64x36xbf16, #tpu.memory_space<vmem>>, vector<64x36xbf16>
    %c0_1 = arith.constant 0 : index
    %c0_2 = arith.constant 0 : index
    %1 = vector.load %arg2[%c0_1, %c0_2] : memref<36x4xbf16, #tpu.memory_space<vmem>>, vector<36x4xbf16>
    %cst = arith.constant dense<0.000000e+00> : vector<64x4xf32>
    %2 = tpu.matmul %0, %1, %cst {dimension_numbers = #tpu.dot_dimension_numbers<[1], [0], [0], [1], [0, 0, 1, 1], [], []>} : vector<64x36xbf16>, vector<36x4xbf16>, vector<64x4xf32> -> vector<64x4xf32>
    %c0_3 = arith.constant 0 : index
    %c0_4 = arith.constant 0 : index
    %3 = vector.load %arg3[%c0_3, %c0_4] : memref<1x4xf32, #tpu.memory_space<vmem>>, vector<1x4xf32>
    %4 = vector.broadcast %3 : vector<1x4xf32> to vector<64x4xf32>
    %5 = arith.addf %2, %4 : vector<64x4xf32>
    %c0_5 = arith.constant 0 : index
    %c0_6 = arith.constant 0 : index
    %6 = vector.load %arg4[%c0_5, %c0_6] : memref<64x4xf32, #tpu.memory_space<vmem>>, vector<64x4xf32>
    tpu.vector_store %arg4[%c0_5, %c0_6], %5 {strides = array<i32>} : memref<64x4xf32, #tpu.memory_space<vmem>>, vector<64x4xf32>,
    return
  }
  func.func @transform_0(%arg0: i32) -> (i32, i32) {
    %c0_i32 = arith.constant 0 : i32
    %c0_i32_0 = arith.constant 0 : i32
    return %arg0, %c0_i32 : i32, i32
  }
  func.func @transform_1(%arg0: i32) -> (i32, i32) {
    %c0_i32 = arith.constant 0 : i32
    %c0_i32_0 = arith.constant 0 : i32
    %c0_i32_1 = arith.constant 0 : i32
    return %c0_i32, %c0_i32_0 : i32, i32
  }
  func.func @transform_2(%arg0: i32) -> (i32, i32) {
    %c0_i32 = arith.constant 0 : i32
    %c0_i32_0 = arith.constant 0 : i32
    %c0_i32_1 = arith.constant 0 : i32
    return %c0_i32, %c0_i32_0 : i32, i32
  }
  func.func @transform_3(%arg0: i32) -> (i32, i32) {
    %c0_i32 = arith.constant 0 : i32
    %c0_i32_0 = arith.constant 0 : i32
    return %arg0, %c0_i32 : i32, i32
  }
}

</mosaic_0001>

<llo_original>
// kernel: downsample_forward.1
$region0: #{downsample_forward.1}
  #allocation0 [shape = 'u32[]', space=smem, size = 0x4, offset = 0x4, fixed_abs, tag = 'smem constant byte address 0x4 - core index']
  #allocation1 [shape = 'u32[144,128]{1,0:T(1,128)}', space=vmem, size = 0x12000, scoped, tag = 'internal scratch']
  %s0 = inlined_call_operand.vmem [shape: bf16[128,36], index: 0, kind: input, shape index: {}]
  %s1 = inlined_call_operand.vmem [shape: bf16[36,4], index: 1, kind: input, shape index: {}]
  %s2 = inlined_call_operand.vmem [shape: f32[1,4], index: 2, kind: input, shape index: {}]
  %s3 = inlined_call_operand.vmem [shape: f32[128,4], index: 3, kind: output, shape index: {}]
  %s4 = sld [smem:[#allocation0]]
  $region45: #{downsample_forward.1} parent=0
    _
  %s6 = ssub.s32 1, %s4
  %s7 = scalar_select 0, %s6, %s4
  loop: start=0, step=1, limit=4
  $region2: #{downsample_forward.1} parent=0 // loop_pre_header
    _
  $region3: #{downsample_forward.1} parent=0 // loop_header
    %s9 = sphi 0, %s13
    %p10 = scmp.ge.s32.totalorder %s9, 4
    %s19 = sphi 0, %s21
    %s22 = sphi 0, %s19
    %s23 = sphi 0, %s22
    %s39 = sphi 0, %s23
    %s43 = sphi 0, %s43
    %s45 = sphi 0, %s43
    %s46 = sphi 0, %s45
    %s60 = sphi 0, %s46
    %s64 = sphi 0, %s64
    %s66 = sphi 0, %s64
    %s67 = sphi 0, %s66
    %s81 = sphi 0, %s67
    %s87 = sphi 0, %s89
    %s90 = sphi 0, %s87
    %s91 = sphi 0, %s90
    %s107 = sphi 0, %s91
  $region4: #{downsample_forward.1} parent=0 // loop_header_branch
    %12 = sbr.rel (%p10) target = $region8
  $region5: #{downsample_forward.1} parent=0 // loop_body
    %s14 = ssub.s32 %s9, 1
    %s15 = ssub.s32 %s9, 2
    %s16 = sadd.s32 %s9, 1
    %s17 = ssub.s32 %s9, %s16
    %p18 = scmp.eq.s32.totalorder %s17, 0
    %s20 = sadd.s32 %s19, 1
    %s21 = scalar_select %p18, %s19, %s20
    %p24 = pneg %p18
    %p25 = scmp.eq.s32.totalorder %s9, 1
    %p26 = por %p24, %p25
    %p27 = scmp.ne.s32.totalorder %s19, %s22
    %p28 = scmp.eq.s32.totalorder %s9, 0
    %p29 = por %p27, %p28
    %p30 = scmp.ne.s32.totalorder %s19, %s22
    %p31 = scmp.eq.s32.totalorder %s14, 1
    %p32 = por %p30, %p31
    %p33 = scmp.ne.s32.totalorder %s22, %s23
    %p34 = scmp.eq.s32.totalorder %s14, 0
    %p35 = por %p33, %p34
    %p36 = scmp.ne.s32.totalorder %s22, %s23
    %p37 = scmp.eq.s32.totalorder %s15, 1
    %p38 = por %p36, %p37
    %p40 = scmp.ne.s32.totalorder %s23, %s39
    %p41 = scmp.eq.s32.totalorder %s15, 0
    %p42 = por %p40, %p41
    %s44 = sadd.s32 %s43, 1
    %p47 = scmp.eq.s32.totalorder %s9, 1
    %p48 = scmp.ne.s32.totalorder %s43, %s45
    %p49 = scmp.eq.s32.totalorder %s9, 0
    %p50 = por %p48, %p49
    %p51 = scmp.ne.s32.totalorder %s43, %s45
    %p52 = scmp.eq.s32.totalorder %s14, 1
    %p53 = por %p51, %p52
    %p54 = scmp.ne.s32.totalorder %s45, %s46
    %p55 = scmp.eq.s32.totalorder %s14, 0
    %p56 = por %p54, %p55
    %p57 = scmp.ne.s32.totalorder %s45, %s46
    %p58 = scmp.eq.s32.totalorder %s15, 1
    %p59 = por %p57, %p58
    %p61 = scmp.ne.s32.totalorder %s46, %s60
    %p62 = scmp.eq.s32.totalorder %s15, 0
    %p63 = por %p61, %p62
    %s65 = sadd.s32 %s64, 1
    %p68 = scmp.eq.s32.totalorder %s9, 1
    %p69 = scmp.ne.s32.totalorder %s64, %s66
    %p70 = scmp.eq.s32.totalorder %s9, 0
    %p71 = por %p69, %p70
    %p72 = scmp.ne.s32.totalorder %s64, %s66
    %p73 = scmp.eq.s32.totalorder %s14, 1
    %p74 = por %p72, %p73
    %p75 = scmp.ne.s32.totalorder %s66, %s67
    %p76 = scmp.eq.s32.totalorder %s14, 0
    %p77 = por %p75, %p76
    %p78 = scmp.ne.s32.totalorder %s66, %s67
    %p79 = scmp.eq.s32.totalorder %s15, 1
    %p80 = por %p78, %p79
    %p82 = scmp.ne.s32.totalorder %s67, %s81
    %p83 = scmp.eq.s32.totalorder %s15, 0
    %p84 = por %p82, %p83
    %s85 = ssub.s32 %s9, %s16
    %p86 = scmp.eq.s32.totalorder %s85, 0
    %s88 = sadd.s32 %s87, 1
    %s89 = scalar_select %p86, %s87, %s88
    %p92 = pneg %p86
    %p93 = scmp.eq.s32.totalorder %s9, 1
    %p94 = por %p92, %p93
    %p95 = scmp.ne.s32.totalorder %s87, %s90
    %p96 = scmp.eq.s32.totalorder %s9, 0
    %p97 = por %p95, %p96
    %p98 = scmp.ne.s32.totalorder %s87, %s90
    %p99 = scmp.eq.s32.totalorder %s14, 1
    %p100 = por %p98, %p99
    %p101 = scmp.ne.s32.totalorder %s90, %s91
    %p102 = scmp.eq.s32.totalorder %s14, 0
    %p103 = por %p101, %p102
    %p104 = scmp.ne.s32.totalorder %s90, %s91
    %p105 = scmp.eq.s32.totalorder %s15, 1
    %p106 = por %p104, %p105
    %p108 = scmp.ne.s32.totalorder %s91, %s107
    %p109 = scmp.eq.s32.totalorder %s15, 0
    %p110 = por %p108, %p109
    %p111 = scmp.le.s32.totalorder 1, %s9
    %p112 = scmp.lt.s32.totalorder %s9, 3
    %p113 = pnand %p111, %p112
    %p114 = pneg %p113
    // Predicated region
    $region9: #{downsample_forward.1} parent=5 // pred_check
      _
    $region10: #{downsample_forward.1} parent=5 // pred_check_branch
      %116 = sbr.rel (%p113) target = $region12
    $region11: #{downsample_forward.1} parent=5 // pred_region
      %s117 = ssub.s32 %s9, 1
      // Predicated region
      $region13: #{downsample_forward.1} parent=11 // pred_check
        %p118 = pneg %p56
      $region14: #{downsample_forward.1} parent=11 // pred_check_branch
        %120 = sbr.rel (%p118) target = $region16
      $region15: #{downsample_forward.1} parent=11 // pred_region
        _
      $region16: #{downsample_forward.1} parent=11 // pred_fallthru
        _
      // Predicated region
      $region17: #{downsample_forward.1} parent=11 // pred_check
        %p121 = pneg %p77
      $region18: #{downsample_forward.1} parent=11 // pred_check_branch
        %123 = sbr.rel (%p121) target = $region20
      $region19: #{downsample_forward.1} parent=11 // pred_region
        _
      $region20: #{downsample_forward.1} parent=11 // pred_fallthru
        _
    $region12: #{downsample_forward.1} parent=5 // pred_fallthru
      _
    %p124 = scmp.lt.s32.totalorder %s9, 2
    // Predicated region
    $region21: #{downsample_forward.1} parent=5 // pred_check
      %p125 = pneg %p124
    $region22: #{downsample_forward.1} parent=5 // pred_check_branch
      %127 = sbr.rel (%p125) target = $region24
    $region23: #{downsample_forward.1} parent=5 // pred_region
      // Predicated region
      $region25: #{downsample_forward.1} parent=23 // pred_check
        %p128 = pneg %p29
      $region26: #{downsample_forward.1} parent=23 // pred_check_branch
        %130 = sbr.rel (%p128) target = $region28
      $region27: #{downsample_forward.1} parent=23 // pred_region
        %s131 = smul.u32 8, %s9
        %p132 = scmp.lt.s32.totalorder %s131, 15
        %s133 = scalar_select %p132, %s131, 15
        %s134 = smul.addr %s133, 4
        %s135 = scalar_lea.vmem %s0, %s134
        %s136 = smul.u32 8, %s9
      $region28: #{downsample_forward.1} parent=23 // pred_fallthru
        _
    $region24: #{downsample_forward.1} parent=5 // pred_fallthru
      _
    %p137 = scmp.le.s32.totalorder 1, %s9
    %p138 = scmp.lt.s32.totalorder %s9, 3
    %p139 = pnand %p137, %p138
    %p140 = pneg %p139
    // Predicated region
    $region29: #{downsample_forward.1} parent=5 // pred_check
      _
    $region30: #{downsample_forward.1} parent=5 // pred_check_branch
      %142 = sbr.rel (%p139) target = $region32
    $region31: #{downsample_forward.1} parent=5 // pred_region
      %s143 = ssub.s32 %s9, 1
      %s144 = smul.u32 8, %s14
      %p145 = scmp.lt.s32.totalorder %s144, 15
      %s146 = scalar_select %p145, %s144, 15
      %s147 = smul.addr %s146, 4
      %s148 = scalar_lea.vmem %s0, %s147
      %p149 = pneg %p35
      %p150 = pneg %p32
      %p151 = pneg %p56
      %p152 = pneg %p53
      %p153 = pneg %p77
      %p154 = pneg %p74
      %p155 = pneg %p103
      %p156 = pneg %p100
      %s157 = smul.u32 8, %s14
      %p158 = scmp.lt.s32.totalorder %s157, 15
      %s159 = scalar_select %p158, %s157, 15
      %s160 = smul.addr %s159, 8
      %s161 = scalar_lea.vmem %s3, %s160
      %s162 = smul.u32 8, %s14
      %p163 = scmp.lt.s32.totalorder %s162, 15
      %s164 = scalar_select %p163, %s162, 15
      %s165 = smul.addr %s164, 4
      %s166 = scalar_lea.vmem %s0, %s165
      %s167 = smul.u32 8, %s14
      %s168 = smul.u32 8, %s14
      %p169 = scmp.lt.s32.totalorder %s168, 15
      %s170 = scalar_select %p169, %s168, 15
      %s171 = smul.addr %s170, 8
      %s172 = scalar_lea.vmem %s3, %s171
      %s173 = smul.u32 8, %s14
      %v175 = vld [vmem:[%s166] sm:$0xf]
      %v176 = vld [vmem:[%s166 + $0x4] sm:$0xf]
      %v177 = vld [vmem:[%s166 + $0x8] sm:$0xf]
      %v178 = vld [vmem:[%s166 + $0xc] sm:$0xf]
      %v179 = vld [vmem:[%s166 + $0x10] sm:$0xf]
      %v180 = vld [vmem:[%s166 + $0x14] sm:$0xf]
      %v181 = vld [vmem:[%s166 + $0x18] sm:$0xf]
      %v182 = vld [vmem:[%s166 + $0x1c] sm:$0xf]
      %v183 = vld [vmem:[%s1] sm:$0xf]
      %v184 = vld [vmem:[%s1 + $0x4] sm:$0xf]
      %v185 = vld [vmem:[%s1 + $0x8] sm:$0xf]
      %v186 = vld [vmem:[%s1 + $0xc] sm:$0xf]
      %v187 = vld [vmem:[%s1 + $0x10] sm:$0x3]
      %v188 = vld [vmem:[%s2] sm:$0x1]
      %v190 = vlaneseq
      %v191 = vshrl.u32 %v190, 7
      %v192 = vsub.s32 0, %v191
      %v193 = vrot.slane %v188, %v192
      %v203 = vunpack.c.l.b16 %v175
      %v204 = vunpack.c.l.b16 %v176
      %v205 = vunpack.c.l.b16 %v177
      %v206 = vunpack.c.l.b16 %v178
      %v207 = vunpack.c.l.b16 %v179
      %v208 = vunpack.c.l.b16 %v180
      %v209 = vunpack.c.l.b16 %v181
      %v210 = vunpack.c.l.b16 %v182
      %v211 = vpack.c.b16 %v204, %v203
      %v212 = vpack.c.b16 %v206, %v205
      %v213 = vpack.c.b16 %v208, %v207
      %v214 = vpack.c.b16 %v210, %v209
      %v220 = vunpack.c.l.b16 %v183
      %v221 = vunpack.c.l.b16 %v184
      %v222 = vunpack.c.l.b16 %v185
      %v223 = vunpack.c.l.b16 %v186
      %v224 = vunpack.c.l.b16 %v187
      %v225 = vpack.c.b16 %v221, %v220
      %v226 = vpack.c.b16 %v223, %v222
      %v227 = vpack.c.b16 %v224, %v224
      %vm230 = vcmask 293888
      %v232 = vsel %vm230, %v211, 0
      %v235 = vsel %vm230, %v212, 0
      %v238 = vsel %vm230, %v213, 0
      %v241 = vsel %vm230, %v214, 0
      %vm243 = vcmask 1041408
      %v245 = vsel %vm243, %v227, 0
      %247 = vmatprep.subr.bf16.mxu0 0
      %248 = vmatpush1.bf16.msra.mxu0 %v225
      %249 = vmatprep.subr.bf16.mxu0 0
      %250 = vmatpush1.bf16.msra.mxu0 %v226
      %251 = vmatprep.subr.bf16.mxu0 0
      %252 = vmatpush1.bf16.msra.mxu0 %v245
      %253 = vmatprep.subr.bf16.mxu0 0
      %254 = vmatpush1.bf16.msra.mxu0 0
      %255 = vmatprep.subr.bf16.mxu0 0
      %256 = vmatpush1.bf16.msra.mxu0 0
      %257 = vmatprep.subr.bf16.mxu0 0
      %258 = vmatpush1.bf16.msra.mxu0 0
      %259 = vmatprep.subr.bf16.mxu0 0
      %260 = vmatpush1.bf16.msra.mxu0 0
      %261 = vmatprep.subr.bf16.mxu0 0
      %262 = vmatpush1.bf16.msra.mxu0 0
      %263 = vmatprep.subr.bf16.mxu0 0
      %264 = vmatpush1.bf16.msra.mxu0 0
      %265 = vmatprep.subr.bf16.mxu0 0
      %266 = vmatpush1.bf16.msra.mxu0 0
      %267 = vmatprep.subr.bf16.mxu0 0
      %268 = vmatpush1.bf16.msra.mxu0 0
      %269 = vmatprep.subr.bf16.mxu0 0
      %270 = vmatpush1.bf16.msra.mxu0 0
      %271 = vmatprep.subr.bf16.mxu0 0
      %272 = vmatpush1.bf16.msra.mxu0 0
      %273 = vmatprep.subr.bf16.mxu0 0
      %274 = vmatpush1.bf16.msra.mxu0 0
      %275 = vmatprep.subr.bf16.mxu0 0
      %276 = vmatpush1.bf16.msra.mxu0 0
      %277 = vmatprep.subr.bf16.mxu0 0
      %278 = vmatpush1.bf16.msra.mxu0 0
      %279 = vmatprep.mubr.bf16.mxu0 0
      %280 = vmatmul.mubr.bf16.gmra.mrb[0].mxu0 %v232
      %v281 = vpop.f32.mrb[0].mxu0
      %v282 = vadd.f32 %v193, %v281
      %v283 = vpop.f32.mrb[0].mxu0
      %v284 = vpop.f32.mrb[0].mxu0
      %v285 = vadd.f32 %v193, %v284
      %v286 = vpop.f32.mrb[0].mxu0
      %287 = vmatprep.mubr.bf16.mxu0 0
      %288 = vmatmul.mubr.bf16.gmra.mrb[0].mxu0 %v235
      %v289 = vpop.f32.mrb[0].mxu0
      %v290 = vadd.f32 %v193, %v289
      %v291 = vpop.f32.mrb[0].mxu0
      %v292 = vpop.f32.mrb[0].mxu0
      %v293 = vadd.f32 %v193, %v292
      %v294 = vpop.f32.mrb[0].mxu0
      %295 = vmatprep.mubr.bf16.mxu0 0
      %296 = vmatmul.mubr.bf16.gmra.mrb[0].mxu0 %v238
      %v297 = vpop.f32.mrb[0].mxu0
      %v298 = vadd.f32 %v193, %v297
      %v299 = vpop.f32.mrb[0].mxu0
      %v300 = vpop.f32.mrb[0].mxu0
      %v301 = vadd.f32 %v193, %v300
      %v302 = vpop.f32.mrb[0].mxu0
      %303 = vmatprep.mubr.bf16.mxu0 0
      %304 = vmatmul.mubr.bf16.gmra.mrb[0].mxu0 %v241
      %v305 = vpop.f32.mrb[0].mxu0
      %v306 = vadd.f32 %v193, %v305
      %v307 = vpop.f32.mrb[0].mxu0
      %v308 = vpop.f32.mrb[0].mxu0
      %v309 = vadd.f32 %v193, %v308
      %v310 = vpop.f32.mrb[0].mxu0
      %311 = vdwg.mxu0
      %vm312 = vcmask 31744
      %313 = vst.msk [vmem:[%s172] sm:$0xff] %vm312, %v282
      %314 = vst.msk [vmem:[%s172 + $0x8] sm:$0xff] %vm312, %v285
      %315 = vst.msk [vmem:[%s172 + $0x10] sm:$0xff] %vm312, %v290
      %316 = vst.msk [vmem:[%s172 + $0x18] sm:$0xff] %vm312, %v293
      %317 = vst.msk [vmem:[%s172 + $0x20] sm:$0xff] %vm312, %v298
      %318 = vst.msk [vmem:[%s172 + $0x28] sm:$0xff] %vm312, %v301
      %319 = vst.msk [vmem:[%s172 + $0x30] sm:$0xff] %vm312, %v306
      %320 = vst.msk [vmem:[%s172 + $0x38] sm:$0xff] %vm312, %v309
      %s321 = smul.u32 8, %s14
      %p322 = scmp.lt.s32.totalorder %s321, 15
      %s323 = scalar_select %p322, %s321, 15
      %s324 = smul.addr %s323, 8
      %s325 = scalar_lea.vmem %s3, %s324
      // Predicated region
      $region33: #{downsample_forward.1} parent=31 // pred_check
        %p326 = pneg %p100
      $region34: #{downsample_forward.1} parent=31 // pred_check_branch
        %328 = sbr.rel (%p326) target = $region36
      $region35: #{downsample_forward.1} parent=31 // pred_region
        %s329 = smul.u32 8, %s14
      $region36: #{downsample_forward.1} parent=31 // pred_fallthru
        _
    $region32: #{downsample_forward.1} parent=5 // pred_fallthru
      _
    %p330 = scmp.le.s32.totalorder 2, %s9
    // Predicated region
    $region37: #{downsample_forward.1} parent=5 // pred_check
      %p331 = pneg %p330
    $region38: #{downsample_forward.1} parent=5 // pred_check_branch
      %333 = sbr.rel (%p331) target = $region40
    $region39: #{downsample_forward.1} parent=5 // pred_region
      %s334 = ssub.s32 %s9, 2
      // Predicated region
      $region41: #{downsample_forward.1} parent=39 // pred_check
        %p335 = pneg %p106
      $region42: #{downsample_forward.1} parent=39 // pred_check_branch
        %337 = sbr.rel (%p335) target = $region44
      $region43: #{downsample_forward.1} parent=39 // pred_region
        %s338 = smul.u32 8, %s15
        %p339 = scmp.lt.s32.totalorder %s338, 15
        %s340 = scalar_select %p339, %s338, 15
        %s341 = smul.addr %s340, 8
        %s342 = scalar_lea.vmem %s3, %s341
      $region44: #{downsample_forward.1} parent=39 // pred_fallthru
        _
    $region40: #{downsample_forward.1} parent=5 // pred_fallthru
      _
  $region6: #{downsample_forward.1} parent=0 // loop_footer
    %s13 = sadd.s32 1, %s9
  $region7: #{downsample_forward.1} parent=0 // loop_footer_branch
    %8 = sbr.rel target = $region3
  $region8: #{downsample_forward.1} parent=0 // loop_exit
    _

</llo_original>
